<compile_context>
chip_gen: v7x
topology: tpu7x:2x2x1
jax: 0.10.0
libtpu: 0.0.40
codegen_flags: <defaults>
</compile_context>

<pallas_src>
import jax
import jax.numpy as jnp
from jax import lax
from jax.experimental import pallas as pl
from jax.experimental.pallas import tpu as pltpu


def _round_up(x, m):
    return ((x + m - 1) // m) * m


def _make_kernel(tk, rem, use_vpu_matvec):
    """Build the kernel body.

    tk:  F-tile width (multiple of 128).
    rem: number of valid columns in the LAST F tile (0 if F % tk == 0).
    use_vpu_matvec: True for f32 inputs (VPU multiply + row-sum), otherwise MXU.
    """

    def kernel(bias_ref, x_ref, w_ref, o_ref, acc_ref):
        # bias_ref: SMEM (1,) f32 scalar-prefetch
        # x_ref:    (tm, tk) native dtype (ragged edges contain junk)
        # w_ref:    (1, tk)  native dtype (tail of last tile is real zeros)
        # o_ref:    (tm, 1)
        # acc_ref:  (tm, 1)  f32 VMEM scratch, persists across the k axis
        k = pl.program_id(1)
        nk = pl.num_programs(1)

        @pl.when(k == 0)
        def _():
            acc_ref[...] = jnp.zeros_like(acc_ref)

        x = x_ref[...]
        if rem:
            # Zero-mask the junk tail columns of the last (ragged) F tile so
            # possible NaN/Inf junk cannot poison the reduction.
            limit = jnp.where(k == nk - 1, rem, tk)
            col = lax.broadcasted_iota(jnp.int32, x.shape, 1)
            x = jnp.where(col < limit, x, jnp.zeros_like(x))

        if use_vpu_matvec:
            # f32 path: keep the narrow N=1 matmul off the MXU.  Elementwise
            # multiply against the sublane-broadcast weight row + lane reduce.
            prod = x.astype(jnp.float32) * w_ref[...].astype(jnp.float32)
            partial = jnp.sum(prod, axis=1, keepdims=True)  # (tm, 1) f32
        else:
            # bf16 (etc.) path: native MXU dot, f32 accumulation, contract
            # dim 1 of both operands (no weight transpose / relayout).
            partial = lax.dot_general(
                x,
                w_ref[...],
                dimension_numbers=(((1,), (1,)), ((), ())),
                preferred_element_type=jnp.float32,
            )  # (tm, 1)
        acc_ref[...] += partial

        @pl.when(k == nk - 1)
        def _():
            b = bias_ref[0].astype(jnp.float32)
            o_ref[...] = jax.nn.sigmoid(acc_ref[...] + b).astype(o_ref.dtype)

    return kernel


def bi_classify_header_one(
    x,
    weight,
    bias,
    *,
    tm_max=256,
    tk_max=16384,
    vmem_limit_bytes=48 * 1024 * 1024,
    min_pallas_elements=1 << 20,
):
    """x: (B, seq_len*768); weight: (1, seq_len*768); bias: (1,) -> (B, 1)."""
    B, F = x.shape
    out_dtype = x.dtype

    # Tiny-shape fallback: pallas_call fixed overhead exceeds the math.
    if B * F < min_pallas_elements:
        acc = jnp.dot(
            x.astype(jnp.float32),
            weight.astype(jnp.float32).T,
            precision=lax.Precision.HIGHEST,
        )
        return jax.nn.sigmoid(acc + bias.astype(jnp.float32)).astype(out_dtype)

    itemsize = jnp.dtype(x.dtype).itemsize
    # Sublane floor: 8 rows for 32-bit, 16 for 16-bit, 32 for 8-bit dtypes.
    sublane = {1: 32, 2: 16}.get(itemsize, 8)

    # Batch tile.
    tm = min(tm_max, _round_up(B, sublane))
    # Guarantee >=2 batch tiles (when B is big enough) so the "parallel" batch
    # axis can shard across v7x's two TensorCores; no-op loss on v5e/v6e.
    if B >= 2 * sublane and pl.cdiv(B, tm) < 2:
        tm = _round_up(pl.cdiv(B, 2), sublane)

    # F tile: lane-aligned, as large as VMEM comfortably allows.
    tk = min(_round_up(tk_max, 128), _round_up(F, 128))
    num_k = pl.cdiv(F, tk)
    rem = F % tk  # valid columns in the last F tile (0 if exact)

    # Pad ONLY the tiny (1, F) weight row so its tail holds real zeros; x is
    # streamed unpadded and its ragged tail is masked in-kernel.
    f_pad = num_k * tk
    if f_pad != F:
        weight = jnp.pad(weight, ((0, 0), (0, f_pad - F)))

    bias_smem = jnp.asarray(bias, jnp.float32).reshape(1)
    use_vpu_matvec = x.dtype == jnp.float32

    grid = (pl.cdiv(B, tm), num_k)
    cost = pl.CostEstimate(
        flops=2 * B * F,
        transcendentals=B,
        bytes_accessed=itemsize * (B * F + F) + 4 * B,
    )

    kernel = _make_kernel(tk, rem, use_vpu_matvec)

    out = pl.pallas_call(
        kernel,
        out_shape=jax.ShapeDtypeStruct((B, 1), out_dtype),
        grid_spec=pltpu.PrefetchScalarGridSpec(
            num_scalar_prefetch=1,
            grid=grid,
            in_specs=[
                pl.BlockSpec((tm, tk), lambda i, k, b: (i, k)),  # x tile
                pl.BlockSpec((1, tk), lambda i, k, b: (0, k)),   # weight tile
            ],
            out_specs=pl.BlockSpec((tm, 1), lambda i, k, b: (i, 0)),
            scratch_shapes=[pltpu.VMEM((tm, 1), jnp.float32)],
        ),
        compiler_params=pltpu.CompilerParams(
            dimension_semantics=("parallel", "arbitrary"),
            vmem_limit_bytes=vmem_limit_bytes,
        ),
        cost_estimate=cost,
    )(bias_smem, x, weight)

    return out


def reference(x, weight, bias):
    acc = jnp.dot(
        x.astype(jnp.float32),
        weight.astype(jnp.float32).T,
        precision=lax.Precision.HIGHEST,
    )
    return jax.nn.sigmoid(acc + bias.astype(jnp.float32))


def _make_inputs(key, batch, seq_len, dtype):
    in_features = seq_len * 768
    kx, kw, kb = jax.random.split(key, 3)
    # Deterministic param init (PyTorch Linear-style uniform bounds).
    bound = 1.0 / jnp.sqrt(jnp.float32(in_features))
    weight = jax.random.uniform(kw, (1, in_features), jnp.float32, -bound, bound)
    bias = jax.random.uniform(kb, (1,), jnp.float32, -bound, bound)
    x = jax.random.normal(kx, (batch, in_features), jnp.float32)
    return x.astype(dtype), weight.astype(dtype), bias


if __name__ == "__main__":
    key = jax.random.PRNGKey(0)
    k1, k2, k3, k4 = jax.random.split(key, 4)
    seq_len = 2  # in_features = 1536

    # 1) Tiny batch, single F tile, forced through the Pallas kernel
    #    (f32 VPU-matvec path, ragged batch block: B=2 < tm=8).
    x, w, b = _make_inputs(k1, 2, seq_len, jnp.float32)
    out = jax.block_until_ready(
        bi_classify_header_one(x, w, b, min_pallas_elements=0)
    )
    ref = reference(x, w, b)
    assert out.shape == (2, 1), out.shape
    assert jnp.allclose(out, ref, atol=1e-5, rtol=1e-5), (out, ref)

    # 2) Ragged F reduction (tk=1024, rem=512) + >=2 batch tiles (megacore
    #    split: B=40 -> tm=24, 2 tiles), f32 VPU path.
    x, w, b = _make_inputs(k2, 40, seq_len, jnp.float32)
    out = jax.block_until_ready(
        bi_classify_header_one(x, w, b, tk_max=1024, min_pallas_elements=0)
    )
    ref = reference(x, w, b)
    assert out.shape == (40, 1), out.shape
    assert jnp.allclose(out, ref, atol=1e-5, rtol=1e-5), (out, ref)

    # 3) bf16 MXU path, 16-sublane batch floor, ragged batch + ragged F tiles.
    x, w, b = _make_inputs(k3, 10, seq_len, jnp.bfloat16)
    out = jax.block_until_ready(
        bi_classify_header_one(x, w, b, tk_max=1024, min_pallas_elements=0)
    )
    ref = reference(x, w, b)
    assert out.shape == (10, 1), out.shape
    assert jnp.allclose(out.astype(jnp.float32), ref, atol=1e-2), (out, ref)

    # 4) Default call: tiny shape takes the XLA fallback (Pallas overhead
    #    would dominate), semantics identical.
    x, w, b = _make_inputs(k4, 2, seq_len, jnp.float32)
    out = jax.block_until_ready(bi_classify_header_one(x, w, b))
    ref = reference(x, w, b)
    assert out.shape == (2, 1), out.shape
    assert jnp.allclose(out, ref, atol=1e-5, rtol=1e-5), (out, ref)

    print("KERNEL_OK")
</pallas_src>

<mosaic_0001>
module attributes {stable_mosaic.version = 11 : i64} {
  func.func @kernel(%arg0: i32, %arg1: i32, %arg2: memref<1xf32, #tpu.memory_space<smem>>, %arg3: memref<8x1536xf32, #tpu.memory_space<vmem>>, %arg4: memref<1x1536xf32, #tpu.memory_space<vmem>>, %arg5: memref<8x1xf32, #tpu.memory_space<vmem>>, %arg6: memref<8x1xf32, #tpu.memory_space<vmem>>) attributes {dimension_semantics = [#tpu.dimension_semantics<parallel>, #tpu.dimension_semantics<arbitrary>], iteration_bounds = array<i64: 1, 1>, scalar_prefetch = 1 : i64, scratch_operands = 1 : i64, tpu.core_type = #tpu.core_type<tc>, window_params = [{transform_indices = @transform_0, window_bounds = array<i64: 8, 1536>}, {transform_indices = @transform_1, window_bounds = array<i64: 1, 1536>}, {transform_indices = @transform_2, window_bounds = array<i64: 8, 1>}]} {
    %c0_i32 = arith.constant 0 : i32
    %0 = arith.cmpi eq, %arg1, %c0_i32 : i32
    %1 = arith.extui %0 : i1 to i32
    %c0_i32_0 = arith.constant 0 : i32
    %2 = arith.cmpi ne, %1, %c0_i32_0 : i32
    scf.if %2 {
      %cst_10 = arith.constant 0.000000e+00 : f32
      %15 = vector.broadcast %cst_10 : f32 to vector<8x1xf32>
      %c0_11 = arith.constant 0 : index
      %c0_12 = arith.constant 0 : index
      %16 = vector.load %arg6[%c0_11, %c0_12] : memref<8x1xf32, #tpu.memory_space<vmem>>, vector<8x1xf32>
      tpu.vector_store %arg6[%c0_11, %c0_12], %15 {strides = array<i32>} : memref<8x1xf32, #tpu.memory_space<vmem>>, vector<8x1xf32>,
    } else {
    }
    %c0 = arith.constant 0 : index
    %c0_1 = arith.constant 0 : index
    %3 = vector.load %arg3[%c0, %c0_1] : memref<8x1536xf32, #tpu.memory_space<vmem>>, vector<8x1536xf32>
    %c0_2 = arith.constant 0 : index
    %c0_3 = arith.constant 0 : index
    %4 = vector.load %arg4[%c0_2, %c0_3] : memref<1x1536xf32, #tpu.memory_space<vmem>>, vector<1x1536xf32>
    %5 = vector.broadcast %4 : vector<1x1536xf32> to vector<8x1536xf32>
    %6 = arith.mulf %3, %5 : vector<8x1536xf32>
    %cst = arith.constant dense<0.000000e+00> : vector<8xf32>
    %7 = vector.multi_reduction <add>, %6, %cst [1] : vector<8x1536xf32> to vector<8xf32>
    %8 = vector.shape_cast %7 : vector<8xf32> to vector<8x1xf32>
    %c0_4 = arith.constant 0 : index
    %c0_5 = arith.constant 0 : index
    %9 = vector.load %arg6[%c0_4, %c0_5] : memref<8x1xf32, #tpu.memory_space<vmem>>, vector<8x1xf32>
    %10 = arith.addf %9, %8 : vector<8x1xf32>
    %c0_6 = arith.constant 0 : index
    %c0_7 = arith.constant 0 : index
    %11 = vector.load %arg6[%c0_6, %c0_7] : memref<8x1xf32, #tpu.memory_space<vmem>>, vector<8x1xf32>
    tpu.vector_store %arg6[%c0_6, %c0_7], %10 {strides = array<i32>} : memref<8x1xf32, #tpu.memory_space<vmem>>, vector<8x1xf32>,
    %c0_i32_8 = arith.constant 0 : i32
    %12 = arith.cmpi eq, %arg1, %c0_i32_8 : i32
    %13 = arith.extui %12 : i1 to i32
    %c0_i32_9 = arith.constant 0 : i32
    %14 = arith.cmpi ne, %13, %c0_i32_9 : i32
    scf.if %14 {
      %c0_10 = arith.constant 0 : index
      %15 = memref.load %arg2[%c0_10] : memref<1xf32, #tpu.memory_space<smem>>
      %c0_11 = arith.constant 0 : index
      %c0_12 = arith.constant 0 : index
      %16 = vector.load %arg6[%c0_11, %c0_12] : memref<8x1xf32, #tpu.memory_space<vmem>>, vector<8x1xf32>
      %17 = vector.broadcast %15 : f32 to vector<8x1xf32>
      %18 = arith.addf %16, %17 : vector<8x1xf32>
      %19 = arith.negf %18 : vector<8x1xf32>
      %20 = math.exp %19 : vector<8x1xf32>
      %cst_13 = arith.constant 1.000000e+00 : f32
      %21 = vector.broadcast %cst_13 : f32 to vector<8x1xf32>
      %22 = arith.addf %21, %20 : vector<8x1xf32>
      %23 = arith.divf %21, %22 : vector<8x1xf32>
      %c0_14 = arith.constant 0 : index
      %c0_15 = arith.constant 0 : index
      %24 = vector.load %arg5[%c0_14, %c0_15] : memref<8x1xf32, #tpu.memory_space<vmem>>, vector<8x1xf32>
      tpu.vector_store %arg5[%c0_14, %c0_15], %23 {strides = array<i32>} : memref<8x1xf32, #tpu.memory_space<vmem>>, vector<8x1xf32>,
    } else {
    }
    return
  }
  func.func @transform_0(%arg0: i32, %arg1: i32, %arg2: memref<1xf32, #tpu.memory_space<smem>>) -> (i32, i32) {
    %c0_i32 = arith.constant 0 : i32
    return %arg0, %arg1 : i32, i32
  }
  func.func @transform_1(%arg0: i32, %arg1: i32, %arg2: memref<1xf32, #tpu.memory_space<smem>>) -> (i32, i32) {
    %c0_i32 = arith.constant 0 : i32
    %c0_i32_0 = arith.constant 0 : i32
    return %c0_i32, %arg1 : i32, i32
  }
  func.func @transform_2(%arg0: i32, %arg1: i32, %arg2: memref<1xf32, #tpu.memory_space<smem>>) -> (i32, i32) {
    %c0_i32 = arith.constant 0 : i32
    %c0_i32_0 = arith.constant 0 : i32
    return %arg0, %c0_i32 : i32, i32
  }
}

</mosaic_0001>

<llo_original>
// kernel: tpu_custom_call.1
$region0: #{tpu_custom_call.1}
  #allocation0 [shape = 'u32[]', space=smem, size = 0x4, offset = 0x4, fixed_abs, tag = 'smem constant byte address 0x4 - core index']
  #allocation1 [shape = 'u32[144,128]{1,0:T(1,128)}', space=vmem, size = 0x12000, scoped, tag = 'internal scratch']
  #allocation2 [shape = 'f32[8,1]{1,0:T(8,128)}', space=vmem, size = 0x1000, scoped, tag = 'scratch operand']
  #allocation3 [shape = 's32[1]{0}', space=sflag, size = 0x4, scoped, tag = 'scoped memory for tpu_custom_call.1']
  #allocation4 [shape = 'f32[1]{0:T(128)S(6)}', space=smem, size = 0x200, scoped, tag = 'prefetched SMEM operand 0']
  %s0 = inlined_call_operand.<no memory space> [shape: f32[1], index: 0, kind: input, shape index: {}]
  %s1 = inlined_call_operand.hbm [shape: f32[2,1536], index: 1, kind: input, shape index: {}]
  %s2 = inlined_call_operand.hbm [shape: f32[1,1536], index: 2, kind: input, shape index: {}]
  %s3 = inlined_call_operand.vmem [shape: f32[2,1], index: 3, kind: output, shape index: {}]
  %s4 = sld [smem:[#allocation0]]
  $region64: #{tpu_custom_call.1} parent=0
    _
  %s6 = ssub.s32 1, %s4
  %s7 = scalar_select 0, %s6, %s4
  %8 = sst [smem:[#allocation4]] %s0
  $region1: #{tpu_custom_call.1} parent=0
    #allocation5 [shape = 'u8[49152]{0}', space=vmem, size = 0xc000, scoped, tag = 'input window, operand 1, single buffered']
    #allocation6 [shape = 's32[1]{0}', space=sflag, size = 0x4, scoped, tag = 'scoped memory for tpu_custom_call.1']
    #allocation7 [shape = 'u8[6144]{0}', space=vmem, size = 0x1800, scoped, tag = 'input window, operand 2, single buffered']
    #allocation8 [shape = 's32[1]{0}', space=sflag, size = 0x4, scoped, tag = 'scoped memory for tpu_custom_call.1']
    #allocation9 [shape = 'u8[4096]{0}', space=vmem, size = 0x1000, scoped, tag = 'output window, operand 0, single buffered']
    %9 = vsyncpa [#allocation6], 0
    %10 = vsyncpa [#allocation8], 0
    // Predicated region
    $region2: #{tpu_custom_call.1} parent=1 // pred_check
      _
    $region3: #{tpu_custom_call.1} parent=1 // pred_check_branch
      %12 = sbr.rel (0) target = $region5
    $region4: #{tpu_custom_call.1} parent=1 // pred_region
      %s14 = ssub.s32 1536, 384
      %15 = vsyncadd [#allocation6], %s14
      %s16 = sshll.u32 [#allocation5], 4
      %s17 = int_to_ptr.vmem [resolvable:$true] %s16
      %22 = dma.hbm_to_vmem [thread:$0]  %s1, 384, %s17, [#allocation6], 384, 384, 24
    $region5: #{tpu_custom_call.1} parent=1 // pred_fallthru
      _
    // Predicated region
    $region6: #{tpu_custom_call.1} parent=1 // pred_check
      _
    $region7: #{tpu_custom_call.1} parent=1 // pred_check_branch
      %24 = sbr.rel (0) target = $region9
    $region8: #{tpu_custom_call.1} parent=1 // pred_region
      %s26 = ssub.s32 192, 192
      %27 = vsyncadd [#allocation8], %s26
      %s29 = sshll.u32 [#allocation7], 4
      %s30 = int_to_ptr.vmem [resolvable:$true] %s29
      %32 = dma.hbm_to_vmem [thread:$0]  %s2, 192, %s30, [#allocation8]
    $region9: #{tpu_custom_call.1} parent=1 // pred_fallthru
      _
    // Predicated region
    $region10: #{tpu_custom_call.1} parent=1 // pred_check
      _
    $region11: #{tpu_custom_call.1} parent=1 // pred_check_branch
      %34 = sbr.rel (0) target = $region13
    $region12: #{tpu_custom_call.1} parent=1 // pred_region
      %35 = dma.done [#allocation6], 1536
    $region13: #{tpu_custom_call.1} parent=1 // pred_fallthru
      _
    // Predicated region
    $region14: #{tpu_custom_call.1} parent=1 // pred_check
      _
    $region15: #{tpu_custom_call.1} parent=1 // pred_check_branch
      %37 = sbr.rel (0) target = $region17
    $region16: #{tpu_custom_call.1} parent=1 // pred_region
      %38 = dma.done [#allocation8], 192
    $region17: #{tpu_custom_call.1} parent=1 // pred_fallthru
      _
    %p39 = scmp.eq.s32.totalorder 0, 0
    // Predicated region
    $region18: #{tpu_custom_call.1} parent=1 // pred_check
      %p40 = pneg %p39
    $region19: #{tpu_custom_call.1} parent=1 // pred_check_branch
      %42 = sbr.rel (%p40) target = $region21
    $region20: #{tpu_custom_call.1} parent=1 // pred_region
      %vm43 = vcmask 7168
      %44 = vst.msk [vmem:[#allocation2] sm:$0xff] %vm43, 0.0
    $region21: #{tpu_custom_call.1} parent=1 // pred_fallthru
      _
    %v45 = vld [vmem:[#allocation5] sm:$0xff]
    %v46 = vld [vmem:[#allocation5 + $0x8] sm:$0xff]
    %v47 = vld [vmem:[#allocation5 + $0x10] sm:$0xff]
    %v48 = vld [vmem:[#allocation5 + $0x18] sm:$0xff]
    %v49 = vld [vmem:[#allocation5 + $0x20] sm:$0xff]
    %v50 = vld [vmem:[#allocation5 + $0x28] sm:$0xff]
    %v51 = vld [vmem:[#allocation5 + $0x30] sm:$0xff]
    %v52 = vld [vmem:[#allocation5 + $0x38] sm:$0xff]
    %v53 = vld [vmem:[#allocation5 + $0x40] sm:$0xff]
    %v54 = vld [vmem:[#allocation5 + $0x48] sm:$0xff]
    %v55 = vld [vmem:[#allocation5 + $0x50] sm:$0xff]
    %v56 = vld [vmem:[#allocation5 + $0x58] sm:$0xff]
    %v57 = vld [vmem:[#allocation7] sm:$0xff]
    %v58 = vld [vmem:[#allocation7 + $0x8] sm:$0xf]
    %v61 = vlaneseq
    %v62 = vshrl.u32 %v61, 7
    %v63 = vsub.s32 0, %v62
    %v64 = vrot.slane %v57, %v63
    %v65 = vlaneseq
    %v66 = vshrl.u32 %v65, 7
    %v67 = vsub.s32 1, %v66
    %v68 = vrot.slane %v57, %v67
    %v69 = vlaneseq
    %v70 = vshrl.u32 %v69, 7
    %v71 = vsub.s32 2, %v70
    %v72 = vrot.slane %v57, %v71
    %v73 = vlaneseq
    %v74 = vshrl.u32 %v73, 7
    %v75 = vsub.s32 3, %v74
    %v76 = vrot.slane %v57, %v75
    %v77 = vlaneseq
    %v78 = vshrl.u32 %v77, 7
    %v79 = vsub.s32 4, %v78
    %v80 = vrot.slane %v57, %v79
    %v81 = vlaneseq
    %v82 = vshrl.u32 %v81, 7
    %v83 = vsub.s32 5, %v82
    %v84 = vrot.slane %v57, %v83
    %v85 = vlaneseq
    %v86 = vshrl.u32 %v85, 7
    %v87 = vsub.s32 6, %v86
    %v88 = vrot.slane %v57, %v87
    %v89 = vlaneseq
    %v90 = vshrl.u32 %v89, 7
    %v91 = vsub.s32 7, %v90
    %v92 = vrot.slane %v57, %v91
    %v93 = vlaneseq
    %v94 = vshrl.u32 %v93, 7
    %v95 = vsub.s32 0, %v94
    %v96 = vrot.slane %v58, %v95
    %v97 = vlaneseq
    %v98 = vshrl.u32 %v97, 7
    %v99 = vsub.s32 1, %v98
    %v100 = vrot.slane %v58, %v99
    %v101 = vlaneseq
    %v102 = vshrl.u32 %v101, 7
    %v103 = vsub.s32 2, %v102
    %v104 = vrot.slane %v58, %v103
    %v105 = vlaneseq
    %v106 = vshrl.u32 %v105, 7
    %v107 = vsub.s32 3, %v106
    %v108 = vrot.slane %v58, %v107
    %v109 = vcombine.low %v64, %v68
    %v110 = vcombine.high %v64, %v68
    %v111 = vcombine.low %v72, %v76
    %v112 = vcombine.high %v72, %v76
    %v114 = vunpack.c.l.s4 1983009808
    %v115 = vunpack.c.0.s8 %v114
    %v116 = vlaneseq
    %v117 = vshrl.u32 %v116, 7
    %v118 = vsub.s32 %v115, %v117
    %v119 = vrot.slane %v109, %v118
    %v121 = vunpack.c.l.s4 1983009808
    %v122 = vunpack.c.0.s8 %v121
    %v123 = vlaneseq
    %v124 = vshrl.u32 %v123, 7
    %v125 = vsub.s32 %v122, %v124
    %v126 = vrot.slane %v110, %v125
    %v128 = vunpack.c.l.s4 1983009808
    %v129 = vunpack.c.0.s8 %v128
    %v130 = vlaneseq
    %v131 = vshrl.u32 %v130, 7
    %v132 = vsub.s32 %v129, %v131
    %v133 = vrot.slane %v111, %v132
    %v135 = vunpack.c.l.s4 1983009808
    %v136 = vunpack.c.0.s8 %v135
    %v137 = vlaneseq
    %v138 = vshrl.u32 %v137, 7
    %v139 = vsub.s32 %v136, %v138
    %v140 = vrot.slane %v112, %v139
    %v141 = vcombine.low %v119, %v133
    %v142 = vcombine.high %v119, %v133
    %v143 = vcombine.low %v126, %v140
    %v144 = vcombine.high %v126, %v140
    %v145 = vcombine.low %v80, %v84
    %v146 = vcombine.high %v80, %v84
    %v147 = vcombine.low %v88, %v92
    %v148 = vcombine.high %v88, %v92
    %v150 = vunpack.c.l.s4 1983009808
    %v151 = vunpack.c.0.s8 %v150
    %v152 = vlaneseq
    %v153 = vshrl.u32 %v152, 7
    %v154 = vsub.s32 %v151, %v153
    %v155 = vrot.slane %v145, %v154
    %v157 = vunpack.c.l.s4 1983009808
    %v158 = vunpack.c.0.s8 %v157
    %v159 = vlaneseq
    %v160 = vshrl.u32 %v159, 7
    %v161 = vsub.s32 %v158, %v160
    %v162 = vrot.slane %v146, %v161
    %v164 = vunpack.c.l.s4 1983009808
    %v165 = vunpack.c.0.s8 %v164
    %v166 = vlaneseq
    %v167 = vshrl.u32 %v166, 7
    %v168 = vsub.s32 %v165, %v167
    %v169 = vrot.slane %v147, %v168
    %v171 = vunpack.c.l.s4 1983009808
    %v172 = vunpack.c.0.s8 %v171
    %v173 = vlaneseq
    %v174 = vshrl.u32 %v173, 7
    %v175 = vsub.s32 %v172, %v174
    %v176 = vrot.slane %v148, %v175
    %v177 = vcombine.low %v155, %v169
    %v178 = vcombine.high %v155, %v169
    %v179 = vcombine.low %v162, %v176
    %v180 = vcombine.high %v162, %v176
    %v181 = vcombine.low %v96, %v100
    %v182 = vcombine.high %v96, %v100
    %v183 = vcombine.low %v104, %v108
    %v184 = vcombine.high %v104, %v108
    %v186 = vunpack.c.l.s4 1983009808
    %v187 = vunpack.c.0.s8 %v186
    %v188 = vlaneseq
    %v189 = vshrl.u32 %v188, 7
    %v190 = vsub.s32 %v187, %v189
    %v191 = vrot.slane %v181, %v190
    %v193 = vunpack.c.l.s4 1983009808
    %v194 = vunpack.c.0.s8 %v193
    %v195 = vlaneseq
    %v196 = vshrl.u32 %v195, 7
    %v197 = vsub.s32 %v194, %v196
    %v198 = vrot.slane %v182, %v197
    %v200 = vunpack.c.l.s4 1983009808
    %v201 = vunpack.c.0.s8 %v200
    %v202 = vlaneseq
    %v203 = vshrl.u32 %v202, 7
    %v204 = vsub.s32 %v201, %v203
    %v205 = vrot.slane %v183, %v204
    %v207 = vunpack.c.l.s4 1983009808
    %v208 = vunpack.c.0.s8 %v207
    %v209 = vlaneseq
    %v210 = vshrl.u32 %v209, 7
    %v211 = vsub.s32 %v208, %v210
    %v212 = vrot.slane %v184, %v211
    %v213 = vcombine.low %v191, %v205
    %v214 = vcombine.high %v191, %v205
    %v215 = vcombine.low %v198, %v212
    %v216 = vcombine.high %v198, %v212
    %v229 = vmul.f32 %v45, %v141
    %v230 = vmul.f32 %v46, %v177
    %v231 = vmul.f32 %v47, %v213
    %v232 = vmul.f32 %v48, %v142
    %v233 = vmul.f32 %v49, %v178
    %v234 = vmul.f32 %v50, %v214
    %v235 = vmul.f32 %v51, %v143
    %v236 = vmul.f32 %v52, %v179
    %v237 = vmul.f32 %v53, %v215
    %v238 = vmul.f32 %v54, %v144
    %v239 = vmul.f32 %v55, %v180
    %v240 = vmul.f32 %v56, %v216
    %v253 = vcombine.low %v229, %v232
    %v254 = vcombine.high %v229, %v232
    %v255 = vcombine.low %v235, %v238
    %v256 = vcombine.high %v235, %v238
    %v258 = vunpack.c.l.s4 1983009808
    %v259 = vunpack.c.0.s8 %v258
    %v260 = vlaneseq
    %v261 = vshrl.u32 %v260, 7
    %v262 = vsub.s32 %v259, %v261
    %v263 = vrot.slane %v253, %v262
    %v265 = vunpack.c.l.s4 1983009808
    %v266 = vunpack.c.0.s8 %v265
    %v267 = vlaneseq
    %v268 = vshrl.u32 %v267, 7
    %v269 = vsub.s32 %v266, %v268
    %v270 = vrot.slane %v254, %v269
    %v272 = vunpack.c.l.s4 1983009808
    %v273 = vunpack.c.0.s8 %v272
    %v274 = vlaneseq
    %v275 = vshrl.u32 %v274, 7
    %v276 = vsub.s32 %v273, %v275
    %v277 = vrot.slane %v255, %v276
    %v279 = vunpack.c.l.s4 1983009808
    %v280 = vunpack.c.0.s8 %v279
    %v281 = vlaneseq
    %v282 = vshrl.u32 %v281, 7
    %v283 = vsub.s32 %v280, %v282
    %v284 = vrot.slane %v256, %v283
    %v285 = vcombine.low %v263, %v277
    %v286 = vcombine.high %v263, %v277
    %v287 = vcombine.low %v270, %v284
    %v288 = vcombine.high %v270, %v284
    %v289 = vcombine.low %v230, %v233
    %v290 = vcombine.high %v230, %v233
    %v291 = vcombine.low %v236, %v239
    %v292 = vcombine.high %v236, %v239
    %v294 = vunpack.c.l.s4 1983009808
    %v295 = vunpack.c.0.s8 %v294
    %v296 = vlaneseq
    %v297 = vshrl.u32 %v296, 7
    %v298 = vsub.s32 %v295, %v297
    %v299 = vrot.slane %v289, %v298
    %v301 = vunpack.c.l.s4 1983009808
    %v302 = vunpack.c.0.s8 %v301
    %v303 = vlaneseq
    %v304 = vshrl.u32 %v303, 7
    %v305 = vsub.s32 %v302, %v304
    %v306 = vrot.slane %v290, %v305
    %v308 = vunpack.c.l.s4 1983009808
    %v309 = vunpack.c.0.s8 %v308
    %v310 = vlaneseq
    %v311 = vshrl.u32 %v310, 7
    %v312 = vsub.s32 %v309, %v311
    %v313 = vrot.slane %v291, %v312
    %v315 = vunpack.c.l.s4 1983009808
    %v316 = vunpack.c.0.s8 %v315
    %v317 = vlaneseq
    %v318 = vshrl.u32 %v317, 7
    %v319 = vsub.s32 %v316, %v318
    %v320 = vrot.slane %v292, %v319
    %v321 = vcombine.low %v299, %v313
    %v322 = vcombine.high %v299, %v313
    %v323 = vcombine.low %v306, %v320
    %v324 = vcombine.high %v306, %v320
    %v325 = vcombine.low %v231, %v234
    %v326 = vcombine.high %v231, %v234
    %v327 = vcombine.low %v237, %v240
    %v328 = vcombine.high %v237, %v240
    %v330 = vunpack.c.l.s4 1983009808
    %v331 = vunpack.c.0.s8 %v330
    %v332 = vlaneseq
    %v333 = vshrl.u32 %v332, 7
    %v334 = vsub.s32 %v331, %v333
    %v335 = vrot.slane %v325, %v334
    %v337 = vunpack.c.l.s4 1983009808
    %v338 = vunpack.c.0.s8 %v337
    %v339 = vlaneseq
    %v340 = vshrl.u32 %v339, 7
    %v341 = vsub.s32 %v338, %v340
    %v342 = vrot.slane %v326, %v341
    %v344 = vunpack.c.l.s4 1983009808
    %v345 = vunpack.c.0.s8 %v344
    %v346 = vlaneseq
    %v347 = vshrl.u32 %v346, 7
    %v348 = vsub.s32 %v345, %v347
    %v349 = vrot.slane %v327, %v348
    %v351 = vunpack.c.l.s4 1983009808
    %v352 = vunpack.c.0.s8 %v351
    %v353 = vlaneseq
    %v354 = vshrl.u32 %v353, 7
    %v355 = vsub.s32 %v352, %v354
    %v356 = vrot.slane %v328, %v355
    %v357 = vcombine.low %v335, %v349
    %v358 = vcombine.high %v335, %v349
    %v359 = vcombine.low %v342, %v356
    %v360 = vcombine.high %v342, %v356
    %v373 = vadd.f32 %v285, %v286
    %v374 = vadd.f32 %v373, %v287
    %v375 = vadd.f32 %v374, %v288
    %v376 = vadd.f32 %v375, %v321
    %v377 = vadd.f32 %v376, %v322
    %v378 = vadd.f32 %v377, %v323
    %v379 = vadd.f32 %v378, %v324
    %v380 = vadd.f32 %v379, %v357
    %v381 = vadd.f32 %v380, %v358
    %v382 = vadd.f32 %v381, %v359
    %v383 = vadd.f32 %v382, %v360
    %384 = vadd.xlane.f32.xlu0 %v383
    %v385 = vpop.xlane.xlu0 %384
    %v386 = vld [vmem:[#allocation2] sm:$0xff]
    %v387 = vadd.f32 %v386, %v385
    %vm388 = vcmask 7168
    %389 = vst.msk [vmem:[#allocation2] sm:$0xff] %vm388, %v387
    // Predicated region
    $region22: #{tpu_custom_call.1} parent=1 // pred_check
      %p390 = pneg %p39
    $region23: #{tpu_custom_call.1} parent=1 // pred_check_branch
      %392 = sbr.rel (%p390) target = $region25
    $region24: #{tpu_custom_call.1} parent=1 // pred_region
      %s393 = sld [smem:[#allocation4]]
      %v394 = vld [vmem:[#allocation2] sm:$0xff]
      %v395 = vstv %s393
      %v396 = vadd.f32 %v394, %v395
      %v397 = vxor.u32 %v396, 2147483648
      %v398 = vmul.f32 %v397, 1.442695
      %v399 = vpow.pop %v398
      %v400 = vadd.f32 %v399, 1.0
      %v401 = vrcp.pop %v400
      %v402 = vmul.f32 1.0, %v401
      %403 = vst.msk [vmem:[#allocation9] sm:$0xff] %vm388, %v402
    $region25: #{tpu_custom_call.1} parent=1 // pred_fallthru
      _
    // Predicated region
    $region26: #{tpu_custom_call.1} parent=1 // pred_check
      _
    $region27: #{tpu_custom_call.1} parent=1 // pred_check_branch
      %405 = sbr.rel (0) target = $region29
    $region28: #{tpu_custom_call.1} parent=1 // pred_region
      // Predicated region
      $region30: #{tpu_custom_call.1} parent=28 // pred_check
        _
      $region31: #{tpu_custom_call.1} parent=28 // pred_check_branch
        %407 = sbr.rel (0) target = $region33
      $region32: #{tpu_custom_call.1} parent=28 // pred_region
        // Predicated region
        $region34: #{tpu_custom_call.1} parent=32 // pred_check
          _
        $region35: #{tpu_custom_call.1} parent=32 // pred_check_branch
          %409 = sbr.rel target = $region37
        $region36: #{tpu_custom_call.1} parent=32 // pred_region
          // Predicated region
          $region49: #{tpu_custom_call.1} parent=36 // pred_check
            _
          $region50: #{tpu_custom_call.1} parent=36 // pred_check_branch
            %424 = sbr.rel (0) target = $region52
          $region51: #{tpu_custom_call.1} parent=36 // pred_region
            loop: start=0, step=1, limit=1
            $region53: #{tpu_custom_call.1} parent=51 // loop_pre_header
              _
            $region54: #{tpu_custom_call.1} parent=51 // loop_header
              %s427 = sphi 0, %s431
              %p428 = scmp.ge.s32.totalorder %s427, 1
              %s432 = sphi [#allocation9], [#allocation9]
              %s433 = sphi %s3, %s3
            $region55: #{tpu_custom_call.1} parent=51 // loop_header_branch
              %430 = sbr.rel (%p428) target = $region59
            $region56: #{tpu_custom_call.1} parent=51 // loop_body
              %v434 = vld [vmem:[%s432] sm:$0x3]
              %435 = vst [vmem:[%s433] sm:$0x3] %v434
            $region57: #{tpu_custom_call.1} parent=51 // loop_footer
              %s431 = sadd.s32 1, %s427
            $region58: #{tpu_custom_call.1} parent=51 // loop_footer_branch
              %426 = sbr.rel target = $region54
            $region59: #{tpu_custom_call.1} parent=51 // loop_exit
              _
          $region52: #{tpu_custom_call.1} parent=36 // pred_fallthru
            _
        $region37: #{tpu_custom_call.1} parent=32 // pred_fallthru
          _
        // Predicated region
        $region38: #{tpu_custom_call.1} parent=32 // pred_check
          _
        $region39: #{tpu_custom_call.1} parent=32 // pred_check_branch
          %411 = sbr.rel (0) target = $region41
        $region40: #{tpu_custom_call.1} parent=32 // pred_region
          loop: start=0, step=1, limit=1
          $region42: #{tpu_custom_call.1} parent=40 // loop_pre_header
            _
          $region43: #{tpu_custom_call.1} parent=40 // loop_header
            %s414 = sphi 0, %s418
            %p415 = scmp.ge.s32.totalorder %s414, 1
            %s419 = sphi [#allocation9], [#allocation9]
            %s420 = sphi %s3, %s3
          $region44: #{tpu_custom_call.1} parent=40 // loop_header_branch
            %417 = sbr.rel (%p415) target = $region48
          $region45: #{tpu_custom_call.1} parent=40 // loop_body
            %v421 = vld [vmem:[%s419] sm:$0x3]
            %422 = vst [vmem:[%s420] sm:$0x3] %v421
          $region46: #{tpu_custom_call.1} parent=40 // loop_footer
            %s418 = sadd.s32 1, %s414
          $region47: #{tpu_custom_call.1} parent=40 // loop_footer_branch
            %413 = sbr.rel target = $region43
          $region48: #{tpu_custom_call.1} parent=40 // loop_exit
            _
        $region41: #{tpu_custom_call.1} parent=32 // pred_fallthru
          _
      $region33: #{tpu_custom_call.1} parent=28 // pred_fallthru
        _
      %436 = vnop
    $region29: #{tpu_custom_call.1} parent=1 // pred_fallthru
      _
    // Predicated region
    $region60: #{tpu_custom_call.1} parent=1 // pred_check
      _
    $region61: #{tpu_custom_call.1} parent=1 // pred_check_branch
      %438 = sbr.rel (0) target = $region63
    $region62: #{tpu_custom_call.1} parent=1 // pred_region
      _
    $region63: #{tpu_custom_call.1} parent=1 // pred_fallthru
      _
    %439 = vsyncpa [#allocation6], 1
    %440 = vsyncpa [#allocation8], 1

</llo_original>
